<compile_context>
chip_gen: v7x
topology: tpu7x:2x2x1
jax: 0.10.0
libtpu: 0.0.40
codegen_flags: <defaults>
</compile_context>

<pallas_src>
import functools

import jax
import jax.numpy as jnp
from jax.experimental import pallas as pl
from jax.experimental.pallas import tpu as pltpu


def _gk_kernel(feat_ref, fn2g_ref, ct_ref, cn2g_ref, w_ref, mask_ref, oh_ref,
               out_ref, *, num_classes):
    """One batch tile.

    feat_ref : (TB, Dp)   bf16 features (zero-padded along D)
    fn2g_ref : (TB, 1)    f32  gc * ||f||^2
    ct_ref   : (Dp, Mp)   bf16 centres^T pre-scaled by 2*gc (zero-padded)
    cn2g_ref : (1, Mp)    f32  gc * ||c||^2 (resident)
    w_ref    : (1, Mp)    f32  raw weight (resident)
    mask_ref : (TB, Mp)   int8 neighbour mask (1 iff centre is a neighbour)
    oh_ref   : (Mp, L)    bf16 one-hot(centre_labels), L = 128*ceil(2C/128)
    out_ref  : (TB, L)    f32  fused output: log_p in [0, C), p in [C, 2C)
    """
    # MXU #1: fc = 2*gc * f.c for ALL centres, f32 accumulation.
    fc = jnp.dot(feat_ref[...], ct_ref[...],
                 preferred_element_type=jnp.float32)              # (TB, Mp)

    # -gc*d2, clamped at 0 (d2 >= 0), with weight folded into the exponent.
    arg = jnp.minimum(fc - fn2g_ref[...] - cn2g_ref[...], 0.0) + w_ref[...]

    # Explicit mask multiply preserves exact zeros for the 1e-10 floor.
    vals = jnp.exp(arg) * mask_ref[...].astype(jnp.float32)       # (TB, Mp) f32

    # MXU #2 (bf16 x bf16, f32 acc): per-class sum via one-hot labels.
    praw = jnp.dot(vals.astype(oh_ref.dtype), oh_ref[...],
                   preferred_element_type=jnp.float32)            # (TB, L)

    lane = jax.lax.broadcasted_iota(jnp.int32, praw.shape, 1)
    is_cls = lane < num_classes                                   # real class lanes

    # Floor exact zeros (only on real class lanes, matching the reference).
    p = jnp.where(is_cls & (praw == 0.0), jnp.float32(1e-10), praw)
    s = jnp.sum(p, axis=-1, keepdims=True)                        # padding lanes are 0
    p = p * pl.reciprocal(s, approx=True)                         # EUP divide

    # log_p on class lanes, 0 elsewhere (avoid log(0) on padding).
    logp = jnp.log(jnp.where(is_cls, p, 1.0))

    # Fused lane-dense output: log_p in lanes [0, C), p shifted into [C, 2C).
    out_ref[...] = logp + pltpu.roll(p, shift=num_classes, axis=1)


def _round_up(x, m):
    return ((x + m - 1) // m) * m


def _vmem_limit_bytes():
    """Scoped VMEM limit: ~3/4 of physical (48 MiB on v7x, 96 MiB on v5e/v6e)."""
    cap = None
    try:
        info = pltpu.get_tpu_info()
        cap = getattr(info, "vmem_capacity_bytes", None)
    except Exception:
        cap = None
    if not cap:
        return 32 * 1024 * 1024  # conservative default, safe on all generations
    return min((int(cap) * 3) // 4, 100 * 1024 * 1024)


def _choose_batch_tile(batch, d_pad, m_pad, out_lanes, vmem_budget):
    """Largest TB (multiple of 16, <= 512) whose working set fits the budget."""
    def est(tb):
        resident = (d_pad * m_pad * 2        # centres^T (bf16)
                    + m_pad * out_lanes * 2  # one-hot (bf16)
                    + 2 * m_pad * 4)         # cn2g + weight rows (f32)
        per_step = (tb * d_pad * 2           # feature tile (bf16)
                    + tb * m_pad * 1         # int8 mask tile
                    + tb * 4                 # fn2g
                    + tb * out_lanes * 4)    # output tile
        interm = 3 * tb * m_pad * 4          # fc / arg / vals intermediates
        return resident + 2 * per_step + interm   # double-buffered pipeline
    cap = max(16, _round_up(batch, 16))
    for tb in (512, 256, 128, 64, 32, 16):
        if tb <= cap and est(tb) <= vmem_budget:
            return tb
    # TODO(synk): for very large M the resident centres/one-hot exceed VMEM even
    # at TB=16; that case needs an M grid axis ("arbitrary") with a (TB, L)
    # accumulator scratch (init/finalize via pl.when) instead of full residency.
    return 16


def gaussian_kernels_forward(features, centres, centre_labels, weight, *,
                             num_classes, num_neighbours, sigma,
                             neighbours=None, mxu_dtype=jnp.bfloat16,
                             batch_tile=None):
    """JAX/Pallas equivalent of GaussianKernels.forward -> (log_p, p)."""
    gc = 1.0 / (2.0 * sigma ** 2)

    features = features.astype(jnp.float32)
    centres_f32 = centres.astype(jnp.float32)
    centre_labels = centre_labels.astype(jnp.int32)
    B, D = features.shape
    M = centres_f32.shape[0]
    C = num_classes

    cnorm2 = jnp.sum(centres_f32 * centres_f32, axis=-1)                 # (M,)

    if neighbours is None:
        # find_neighbours via the same MXU-friendly decomposition.
        fn2 = jnp.sum(features * features, axis=-1, keepdims=True)
        d2_all = fn2 + cnorm2[None, :] - 2.0 * (features @ centres_f32.T)
        neighbours = jax.lax.top_k(-d2_all, num_neighbours)[1]           # (B, K)

    # ---- padded geometry -------------------------------------------------
    D_pad = _round_up(D, 128)                  # contraction dim, full MXU width
    M_pad = _round_up(M, 256)                  # lane dim of the distance tile
    out_lanes = 128 * pl.cdiv(2 * C, 128)      # fused log_p | p | zero padding

    vmem_limit = _vmem_limit_bytes()
    if batch_tile is None:
        TB = _choose_batch_tile(B, D_pad, M_pad, out_lanes,
                                int(vmem_limit * 0.8))
    else:
        TB = batch_tile
    B_pad = _round_up(B, TB)
    grid = (B_pad // TB,)

    # ---- operand construction (all padding is exact zeros) ----------------
    # Features: bf16 MXU tile, zero-padded batch/feature dims.
    feats_p = jnp.zeros((B_pad, D_pad), jnp.float32).at[:B, :D].set(features)
    feats_mxu = feats_p.astype(mxu_dtype)                                # (Bp, Dp)

    # gc * ||f||^2 from full-precision features (tiny per-row stream).
    fn2g = jnp.zeros((B_pad, 1), jnp.float32).at[:B, 0].set(
        gc * jnp.sum(features * features, axis=-1))                      # (Bp, 1)

    # Centres^T pre-scaled by 2*gc, then cast to bf16 (VMEM-resident).
    ct_pad = jnp.zeros((D_pad, M_pad), jnp.float32).at[:D, :M].set(
        (2.0 * gc) * centres_f32.T)
    ct_mxu = ct_pad.astype(mxu_dtype)                                    # (Dp, Mp)

    # Resident f32 rows: gc*||c||^2 and raw weight.
    cn2g = jnp.zeros((1, M_pad), jnp.float32).at[0, :M].set(gc * cnorm2)
    w_row = jnp.zeros((1, M_pad), jnp.float32).at[0, :M].set(
        weight.astype(jnp.float32))

    # int8 neighbour mask (1 iff centre m is a neighbour of sample b).
    # NOTE: .set() de-duplicates indices; top_k neighbours are unique.
    nb_mask = jnp.zeros((B_pad, M_pad), jnp.int8).at[
        jnp.arange(B)[:, None], neighbours].set(jnp.int8(1))             # (Bp, Mp)

    # bf16 one-hot labels (0/1 exact), padded M rows stay all-zero.
    onehot = jnp.zeros((M_pad, out_lanes), jnp.bfloat16).at[
        jnp.arange(M), centre_labels].set(jnp.bfloat16(1.0))             # (Mp, L)

    kernel = functools.partial(_gk_kernel, num_classes=C)

    # Centres / rows / one-hot use a constant block index -> fetched once and
    # kept VMEM-resident across batch tiles; per-step streams are the bf16
    # feature tile, the int8 mask tile, fn2g and the output slab.
    out = pl.pallas_call(
        kernel,
        out_shape=jax.ShapeDtypeStruct((B_pad, out_lanes), jnp.float32),
        grid=grid,
        in_specs=[
            pl.BlockSpec((TB, D_pad), lambda i: (i, 0)),      # features
            pl.BlockSpec((TB, 1), lambda i: (i, 0)),          # gc*||f||^2
            pl.BlockSpec((D_pad, M_pad), lambda i: (0, 0)),   # scaled centres^T
            pl.BlockSpec((1, M_pad), lambda i: (0, 0)),       # gc*||c||^2
            pl.BlockSpec((1, M_pad), lambda i: (0, 0)),       # weight
            pl.BlockSpec((TB, M_pad), lambda i: (i, 0)),      # int8 mask
            pl.BlockSpec((M_pad, out_lanes), lambda i: (0, 0)),  # one-hot
        ],
        out_specs=pl.BlockSpec((TB, out_lanes), lambda i: (i, 0)),
        compiler_params=pltpu.CompilerParams(
            dimension_semantics=("parallel",),
            vmem_limit_bytes=vmem_limit),
    )(feats_mxu, fn2g, ct_mxu, cn2g, w_row, nb_mask, onehot)

    logp = out[:B, :C]
    p = out[:B, C:2 * C]
    return logp, p


def _reference_forward(features, centres, centre_labels, weight, *,
                       num_classes, sigma, neighbours):
    """Pure-JAX transcription of the torch per-sample loop (for checking)."""
    gc = 1.0 / (2.0 * sigma ** 2)
    kw = jnp.exp(weight)
    ps = []
    for ii in range(features.shape[0]):
        n = neighbours[ii]
        d = jnp.sum((features[ii] - centres[n]) ** 2, axis=1)
        d = jnp.exp(-d * gc) * kw[n]
        lab = centre_labels[n]
        p = jnp.zeros(num_classes, jnp.float32).at[lab].add(d)
        p = jnp.where(p == 0.0, 1e-10, p)
        p = p / jnp.sum(p)
        ps.append(p)
    p = jnp.stack(ps)
    return jnp.log(p), p


if __name__ == "__main__":
    # small, deterministic problem consistent with the module
    B, D = 64, 32         # batch, feature dims
    M = 64                # num_centres
    K = 8                 # num_neighbours
    C = 4                 # num_classes
    sigma = 4.0           # keeps exp(-d2/(2*sigma^2)) well-conditioned

    key = jax.random.PRNGKey(0)
    k1, k2, k3, k4 = jax.random.split(key, 4)
    features = jax.random.normal(k1, (B, D), dtype=jnp.float32)
    centres = jax.random.normal(k2, (M, D), dtype=jnp.float32)
    centre_labels = jax.random.randint(k3, (M,), 0, C, dtype=jnp.int32)
    weight = 0.1 * jax.random.normal(k4, (M,), dtype=jnp.float32)

    # neighbours computed in glue (find_neighbours is not part of the kernel)
    d2 = jnp.sum((features[:, None, :] - centres[None, :, :]) ** 2, axis=-1)
    neighbours = jax.lax.top_k(-d2, K)[1]

    # batch_tile=32 -> grid=(2,) exercises the pipelined / parallel batch axis
    logp, p = gaussian_kernels_forward(
        features, centres, centre_labels, weight,
        num_classes=C, num_neighbours=K, sigma=sigma,
        neighbours=neighbours, batch_tile=32)
    jax.block_until_ready((logp, p))

    ref_logp, ref_p = _reference_forward(
        features, centres, centre_labels, weight,
        num_classes=C, sigma=sigma, neighbours=neighbours)

    assert logp.shape == (B, C) and p.shape == (B, C)
    # Tolerances relaxed vs. pure-f32: bf16 MXU inputs + approx reciprocal.
    assert jnp.allclose(p, ref_p, atol=5e-2, rtol=5e-2)
    assert jnp.allclose(logp, ref_logp, atol=5e-2, rtol=5e-2)
    assert jnp.allclose(jnp.sum(p, axis=-1), 1.0, atol=1e-2)

    # also exercise the fused find_neighbours path and auto tile selection
    logp2, p2 = gaussian_kernels_forward(
        features, centres, centre_labels, weight,
        num_classes=C, num_neighbours=K, sigma=sigma)
    jax.block_until_ready((logp2, p2))
    assert jnp.allclose(p2, ref_p, atol=5e-2, rtol=5e-2)

    print("KERNEL_OK")
</pallas_src>

<mosaic_0001>
module attributes {stable_mosaic.version = 11 : i64} {
  func.func @_gk_kernel(%arg0: i32, %arg1: memref<32x128xbf16, #tpu.memory_space<vmem>>, %arg2: memref<32x1xf32, #tpu.memory_space<vmem>>, %arg3: memref<128x256xbf16, #tpu.memory_space<vmem>>, %arg4: memref<1x256xf32, #tpu.memory_space<vmem>>, %arg5: memref<1x256xf32, #tpu.memory_space<vmem>>, %arg6: memref<32x256xi8, #tpu.memory_space<vmem>>, %arg7: memref<256x128xbf16, #tpu.memory_space<vmem>>, %arg8: memref<32x128xf32, #tpu.memory_space<vmem>>) attributes {dimension_semantics = [#tpu.dimension_semantics<parallel>], iteration_bounds = array<i64: 2>, scalar_prefetch = 0 : i64, scratch_operands = 0 : i64, tpu.core_type = #tpu.core_type<tc>, window_params = [{transform_indices = @transform_0, window_bounds = array<i64: 32, 128>}, {transform_indices = @transform_1, window_bounds = array<i64: 32, 1>}, {pipeline_mode = #tpu.pipeline_mode<synchronous>, transform_indices = @transform_2, window_bounds = array<i64: 128, 256>}, {pipeline_mode = #tpu.pipeline_mode<synchronous>, transform_indices = @transform_3, window_bounds = array<i64: 1, 256>}, {pipeline_mode = #tpu.pipeline_mode<synchronous>, transform_indices = @transform_4, window_bounds = array<i64: 1, 256>}, {transform_indices = @transform_5, window_bounds = array<i64: 32, 256>}, {pipeline_mode = #tpu.pipeline_mode<synchronous>, transform_indices = @transform_6, window_bounds = array<i64: 256, 128>}, {transform_indices = @transform_7, window_bounds = array<i64: 32, 128>}]} {
    %c0 = arith.constant 0 : index
    %c0_0 = arith.constant 0 : index
    %0 = vector.load %arg1[%c0, %c0_0] : memref<32x128xbf16, #tpu.memory_space<vmem>>, vector<32x128xbf16>
    %c0_1 = arith.constant 0 : index
    %c0_2 = arith.constant 0 : index
    %1 = vector.load %arg3[%c0_1, %c0_2] : memref<128x256xbf16, #tpu.memory_space<vmem>>, vector<128x256xbf16>
    %cst = arith.constant dense<0.000000e+00> : vector<32x256xf32>
    %2 = tpu.matmul %0, %1, %cst {dimension_numbers = #tpu.dot_dimension_numbers<[1], [0], [0], [1], [0, 0, 1, 1], [], []>} : vector<32x128xbf16>, vector<128x256xbf16>, vector<32x256xf32> -> vector<32x256xf32>
    %c0_3 = arith.constant 0 : index
    %c0_4 = arith.constant 0 : index
    %3 = vector.load %arg2[%c0_3, %c0_4] : memref<32x1xf32, #tpu.memory_space<vmem>>, vector<32x1xf32>
    %4 = vector.broadcast %3 : vector<32x1xf32> to vector<32x256xf32>
    %5 = arith.subf %2, %4 : vector<32x256xf32>
    %c0_5 = arith.constant 0 : index
    %c0_6 = arith.constant 0 : index
    %6 = vector.load %arg4[%c0_5, %c0_6] : memref<1x256xf32, #tpu.memory_space<vmem>>, vector<1x256xf32>
    %7 = vector.broadcast %6 : vector<1x256xf32> to vector<32x256xf32>
    %8 = arith.subf %5, %7 : vector<32x256xf32>
    %cst_7 = arith.constant 0.000000e+00 : f32
    %9 = vector.broadcast %cst_7 : f32 to vector<32x256xf32>
    %10 = arith.minimumf %8, %9 : vector<32x256xf32>
    %c0_8 = arith.constant 0 : index
    %c0_9 = arith.constant 0 : index
    %11 = vector.load %arg5[%c0_8, %c0_9] : memref<1x256xf32, #tpu.memory_space<vmem>>, vector<1x256xf32>
    %12 = vector.broadcast %11 : vector<1x256xf32> to vector<32x256xf32>
    %13 = arith.addf %10, %12 : vector<32x256xf32>
    %14 = math.exp %13 : vector<32x256xf32>
    %c0_10 = arith.constant 0 : index
    %c0_11 = arith.constant 0 : index
    %15 = vector.load %arg6[%c0_10, %c0_11] : memref<32x256xi8, #tpu.memory_space<vmem>>, vector<32x256xi8>
    %16 = arith.sitofp %15 : vector<32x256xi8> to vector<32x256xf32>
    %17 = arith.mulf %14, %16 : vector<32x256xf32>
    %18 = arith.truncf %17 : vector<32x256xf32> to vector<32x256xbf16>
    %c0_12 = arith.constant 0 : index
    %c0_13 = arith.constant 0 : index
    %19 = vector.load %arg7[%c0_12, %c0_13] : memref<256x128xbf16, #tpu.memory_space<vmem>>, vector<256x128xbf16>
    %cst_14 = arith.constant dense<0.000000e+00> : vector<32x128xf32>
    %20 = tpu.matmul %18, %19, %cst_14 {dimension_numbers = #tpu.dot_dimension_numbers<[1], [0], [0], [1], [0, 0, 1, 1], [], []>} : vector<32x256xbf16>, vector<256x128xbf16>, vector<32x128xf32> -> vector<32x128xf32>
    %21 = tpu.iota {dimensions = array<i32: 1>} : vector<32x128xi32>
    %c4_i32 = arith.constant 4 : i32
    %22 = vector.broadcast %c4_i32 : i32 to vector<32x128xi32>
    %23 = arith.cmpi slt, %21, %22 : vector<32x128xi32>
    %cst_15 = arith.constant 0.000000e+00 : f32
    %24 = vector.broadcast %cst_15 : f32 to vector<32x128xf32>
    %25 = arith.cmpf oeq, %20, %24 : vector<32x128xf32>
    %26 = arith.andi %23, %25 : vector<32x128xi1>
    %cst_16 = arith.constant 1.000000e-10 : f32
    %27 = vector.broadcast %cst_16 : f32 to vector<32x128xf32>
    %28 = arith.select %26, %27, %20 : vector<32x128xi1>, vector<32x128xf32>
    %cst_17 = arith.constant dense<0.000000e+00> : vector<32xf32>
    %29 = vector.multi_reduction <add>, %28, %cst_17 [1] : vector<32x128xf32> to vector<32xf32>
    %30 = vector.shape_cast %29 : vector<32xf32> to vector<32x1xf32>
    %31 = tpu.reciprocal %30 {approx = true} : vector<32x1xf32> -> vector<32x1xf32>
    %32 = vector.broadcast %31 : vector<32x1xf32> to vector<32x128xf32>
    %33 = arith.mulf %28, %32 : vector<32x128xf32>
    %cst_18 = arith.constant 1.000000e+00 : f32
    %34 = vector.broadcast %cst_18 : f32 to vector<32x128xf32>
    %35 = arith.select %23, %33, %34 : vector<32x128xi1>, vector<32x128xf32>
    %36 = math.log %35 : vector<32x128xf32>
    %c4_i32_19 = arith.constant 4 : i32
    %37 = tpu.dynamic_rotate %33 by %c4_i32_19 dim 1 : vector<32x128xf32>, i32 -> vector<32x128xf32>
    %38 = arith.addf %36, %37 : vector<32x128xf32>
    %c0_20 = arith.constant 0 : index
    %c0_21 = arith.constant 0 : index
    %39 = vector.load %arg8[%c0_20, %c0_21] : memref<32x128xf32, #tpu.memory_space<vmem>>, vector<32x128xf32>
    tpu.vector_store %arg8[%c0_20, %c0_21], %38 {strides = array<i32>} : memref<32x128xf32, #tpu.memory_space<vmem>>, vector<32x128xf32>,
    return
  }
  func.func @transform_0(%arg0: i32) -> (i32, i32) {
    %c0_i32 = arith.constant 0 : i32
    %c0_i32_0 = arith.constant 0 : i32
    return %arg0, %c0_i32 : i32, i32
  }
  func.func @transform_1(%arg0: i32) -> (i32, i32) {
    %c0_i32 = arith.constant 0 : i32
    %c0_i32_0 = arith.constant 0 : i32
    return %arg0, %c0_i32 : i32, i32
  }
  func.func @transform_2(%arg0: i32) -> (i32, i32) {
    %c0_i32 = arith.constant 0 : i32
    %c0_i32_0 = arith.constant 0 : i32
    %c0_i32_1 = arith.constant 0 : i32
    return %c0_i32, %c0_i32_0 : i32, i32
  }
  func.func @transform_3(%arg0: i32) -> (i32, i32) {
    %c0_i32 = arith.constant 0 : i32
    %c0_i32_0 = arith.constant 0 : i32
    %c0_i32_1 = arith.constant 0 : i32
    return %c0_i32, %c0_i32_0 : i32, i32
  }
  func.func @transform_4(%arg0: i32) -> (i32, i32) {
    %c0_i32 = arith.constant 0 : i32
    %c0_i32_0 = arith.constant 0 : i32
    %c0_i32_1 = arith.constant 0 : i32
    return %c0_i32, %c0_i32_0 : i32, i32
  }
  func.func @transform_5(%arg0: i32) -> (i32, i32) {
    %c0_i32 = arith.constant 0 : i32
    %c0_i32_0 = arith.constant 0 : i32
    return %arg0, %c0_i32 : i32, i32
  }
  func.func @transform_6(%arg0: i32) -> (i32, i32) {
    %c0_i32 = arith.constant 0 : i32
    %c0_i32_0 = arith.constant 0 : i32
    %c0_i32_1 = arith.constant 0 : i32
    return %c0_i32, %c0_i32_0 : i32, i32
  }
  func.func @transform_7(%arg0: i32) -> (i32, i32) {
    %c0_i32 = arith.constant 0 : i32
    %c0_i32_0 = arith.constant 0 : i32
    return %arg0, %c0_i32 : i32, i32
  }
}

</mosaic_0001>

<llo_original>
// kernel: tpu_custom_call.1
$region0: #{tpu_custom_call.1}
  #allocation0 [shape = 'u32[]', space=smem, size = 0x4, offset = 0x4, fixed_abs, tag = 'smem constant byte address 0x4 - core index']
  #allocation1 [shape = 'u32[144,128]{1,0:T(1,128)}', space=vmem, size = 0x12000, scoped, tag = 'internal scratch']
  %s0 = inlined_call_operand.vmem [shape: bf16[64,128], index: 0, kind: input, shape index: {}]
  %s1 = inlined_call_operand.vmem [shape: f32[64,1], index: 1, kind: input, shape index: {}]
  %s2 = inlined_call_operand.hbm [shape: bf16[128,256], index: 2, kind: input, shape index: {}]
  %s3 = inlined_call_operand.vmem [shape: f32[1,256], index: 3, kind: input, shape index: {}]
  %s4 = inlined_call_operand.vmem [shape: f32[1,256], index: 4, kind: input, shape index: {}]
  %s5 = inlined_call_operand.vmem [shape: s8[64,256], index: 5, kind: input, shape index: {}]
  %s6 = inlined_call_operand.hbm [shape: bf16[256,128], index: 6, kind: input, shape index: {}]
  %s7 = inlined_call_operand.hbm [shape: f32[64,128], index: 7, kind: output, shape index: {}]
  %s8 = sld [smem:[#allocation0]]
  $region69: #{tpu_custom_call.1} parent=0
    _
  %s10 = ssub.s32 1, %s8
  %s11 = scalar_select 0, %s10, %s8
  $region1: #{tpu_custom_call.1} parent=0
    #allocation2 [shape = 'u8[65536]{0}', space=vmem, size = 0x10000, scoped, tag = 'input window, operand 2, single buffered']
    #allocation3 [shape = 's32[2]{0}', space=sflag, size = 0x8, scoped, tag = 'scoped memory for tpu_custom_call.1']
    #allocation4 [shape = 's32[2]{0}', space=sflag, size = 0x8, scoped, tag = 'scoped memory for tpu_custom_call.1']
    #allocation5 [shape = 'u8[65536]{0}', space=vmem, size = 0x10000, scoped, tag = 'input window, operand 6, single buffered']
    #allocation6 [shape = 's32[1]{0}', space=sflag, size = 0x4, scoped, tag = 'scoped memory for tpu_custom_call.1']
    #allocation7 [shape = 'u8[32768]{0}', space=vmem, size = 0x8000, scoped, tag = 'output window, operand 0']
    %12 = vsyncpa [#allocation3], 0
    %13 = vsyncpa [#allocation6], 0
    %14 = vsyncpa [#allocation4], 0
    %s15 = scalar_lea.sflag [#allocation4], 1
    %16 = vsyncpa %s15, 0
    loop: start=0, step=1, limit=4
    $region2: #{tpu_custom_call.1} parent=1 // loop_pre_header
      _
    $region3: #{tpu_custom_call.1} parent=1 // loop_header
      %s18 = sphi 0, %s22
      %p19 = scmp.ge.s32.totalorder %s18, 4
      %s28 = sphi 0, %s30
      %s31 = sphi 0, %s28
      %s32 = sphi 0, %s31
      %s48 = sphi 0, %s32
      %s54 = sphi 0, %s56
      %s57 = sphi 0, %s54
      %s58 = sphi 0, %s57
      %s74 = sphi 0, %s58
      %s78 = sphi 0, %s78
      %s80 = sphi 0, %s78
      %s81 = sphi 0, %s80
      %s95 = sphi 0, %s81
      %s99 = sphi 0, %s99
      %s101 = sphi 0, %s99
      %s102 = sphi 0, %s101
      %s116 = sphi 0, %s102
      %s120 = sphi 0, %s120
      %s122 = sphi 0, %s120
      %s123 = sphi 0, %s122
      %s137 = sphi 0, %s123
      %s143 = sphi 0, %s145
      %s146 = sphi 0, %s143
      %s147 = sphi 0, %s146
      %s163 = sphi 0, %s147
      %s167 = sphi 0, %s167
      %s169 = sphi 0, %s167
      %s170 = sphi 0, %s169
      %s184 = sphi 0, %s170
      %s190 = sphi 0, %s192
      %s193 = sphi 0, %s190
      %s194 = sphi 0, %s193
      %s210 = sphi 0, %s194
    $region4: #{tpu_custom_call.1} parent=1 // loop_header_branch
      %21 = sbr.rel (%p19) target = $region8
    $region5: #{tpu_custom_call.1} parent=1 // loop_body
      %s23 = ssub.s32 %s18, 1
      %s24 = ssub.s32 %s18, 2
      %s25 = sadd.s32 %s18, 1
      %s26 = ssub.s32 %s18, %s25
      %p27 = scmp.eq.s32.totalorder %s26, 0
      %s29 = sadd.s32 %s28, 1
      %s30 = scalar_select %p27, %s28, %s29
      %p33 = pneg %p27
      %p34 = scmp.eq.s32.totalorder %s18, 1
      %p35 = por %p33, %p34
      %p36 = scmp.ne.s32.totalorder %s28, %s31
      %p37 = scmp.eq.s32.totalorder %s18, 0
      %p38 = por %p36, %p37
      %p39 = scmp.ne.s32.totalorder %s28, %s31
      %p40 = scmp.eq.s32.totalorder %s23, 1
      %p41 = por %p39, %p40
      %p42 = scmp.ne.s32.totalorder %s31, %s32
      %p43 = scmp.eq.s32.totalorder %s23, 0
      %p44 = por %p42, %p43
      %p45 = scmp.ne.s32.totalorder %s31, %s32
      %p46 = scmp.eq.s32.totalorder %s24, 1
      %p47 = por %p45, %p46
      %p49 = scmp.ne.s32.totalorder %s32, %s48
      %p50 = scmp.eq.s32.totalorder %s24, 0
      %p51 = por %p49, %p50
      %s52 = ssub.s32 %s18, %s25
      %p53 = scmp.eq.s32.totalorder %s52, 0
      %s55 = sadd.s32 %s54, 1
      %s56 = scalar_select %p53, %s54, %s55
      %p59 = pneg %p53
      %p60 = scmp.eq.s32.totalorder %s18, 1
      %p61 = por %p59, %p60
      %p62 = scmp.ne.s32.totalorder %s54, %s57
      %p63 = scmp.eq.s32.totalorder %s18, 0
      %p64 = por %p62, %p63
      %p65 = scmp.ne.s32.totalorder %s54, %s57
      %p66 = scmp.eq.s32.totalorder %s23, 1
      %p67 = por %p65, %p66
      %p68 = scmp.ne.s32.totalorder %s57, %s58
      %p69 = scmp.eq.s32.totalorder %s23, 0
      %p70 = por %p68, %p69
      %p71 = scmp.ne.s32.totalorder %s57, %s58
      %p72 = scmp.eq.s32.totalorder %s24, 1
      %p73 = por %p71, %p72
      %p75 = scmp.ne.s32.totalorder %s58, %s74
      %p76 = scmp.eq.s32.totalorder %s24, 0
      %p77 = por %p75, %p76
      %s79 = sadd.s32 %s78, 1
      %p82 = scmp.eq.s32.totalorder %s18, 1
      %p83 = scmp.ne.s32.totalorder %s78, %s80
      %p84 = scmp.eq.s32.totalorder %s18, 0
      %p85 = por %p83, %p84
      %p86 = scmp.ne.s32.totalorder %s78, %s80
      %p87 = scmp.eq.s32.totalorder %s23, 1
      %p88 = por %p86, %p87
      %p89 = scmp.ne.s32.totalorder %s80, %s81
      %p90 = scmp.eq.s32.totalorder %s23, 0
      %p91 = por %p89, %p90
      %p92 = scmp.ne.s32.totalorder %s80, %s81
      %p93 = scmp.eq.s32.totalorder %s24, 1
      %p94 = por %p92, %p93
      %p96 = scmp.ne.s32.totalorder %s81, %s95
      %p97 = scmp.eq.s32.totalorder %s24, 0
      %p98 = por %p96, %p97
      %s100 = sadd.s32 %s99, 1
      %p103 = scmp.eq.s32.totalorder %s18, 1
      %p104 = scmp.ne.s32.totalorder %s99, %s101
      %p105 = scmp.eq.s32.totalorder %s18, 0
      %p106 = por %p104, %p105
      %p107 = scmp.ne.s32.totalorder %s99, %s101
      %p108 = scmp.eq.s32.totalorder %s23, 1
      %p109 = por %p107, %p108
      %p110 = scmp.ne.s32.totalorder %s101, %s102
      %p111 = scmp.eq.s32.totalorder %s23, 0
      %p112 = por %p110, %p111
      %p113 = scmp.ne.s32.totalorder %s101, %s102
      %p114 = scmp.eq.s32.totalorder %s24, 1
      %p115 = por %p113, %p114
      %p117 = scmp.ne.s32.totalorder %s102, %s116
      %p118 = scmp.eq.s32.totalorder %s24, 0
      %p119 = por %p117, %p118
      %s121 = sadd.s32 %s120, 1
      %p124 = scmp.eq.s32.totalorder %s18, 1
      %p125 = scmp.ne.s32.totalorder %s120, %s122
      %p126 = scmp.eq.s32.totalorder %s18, 0
      %p127 = por %p125, %p126
      %p128 = scmp.ne.s32.totalorder %s120, %s122
      %p129 = scmp.eq.s32.totalorder %s23, 1
      %p130 = por %p128, %p129
      %p131 = scmp.ne.s32.totalorder %s122, %s123
      %p132 = scmp.eq.s32.totalorder %s23, 0
      %p133 = por %p131, %p132
      %p134 = scmp.ne.s32.totalorder %s122, %s123
      %p135 = scmp.eq.s32.totalorder %s24, 1
      %p136 = por %p134, %p135
      %p138 = scmp.ne.s32.totalorder %s123, %s137
      %p139 = scmp.eq.s32.totalorder %s24, 0
      %p140 = por %p138, %p139
      %s141 = ssub.s32 %s18, %s25
      %p142 = scmp.eq.s32.totalorder %s141, 0
      %s144 = sadd.s32 %s143, 1
      %s145 = scalar_select %p142, %s143, %s144
      %p148 = pneg %p142
      %p149 = scmp.eq.s32.totalorder %s18, 1
      %p150 = por %p148, %p149
      %p151 = scmp.ne.s32.totalorder %s143, %s146
      %p152 = scmp.eq.s32.totalorder %s18, 0
      %p153 = por %p151, %p152
      %p154 = scmp.ne.s32.totalorder %s143, %s146
      %p155 = scmp.eq.s32.totalorder %s23, 1
      %p156 = por %p154, %p155
      %p157 = scmp.ne.s32.totalorder %s146, %s147
      %p158 = scmp.eq.s32.totalorder %s23, 0
      %p159 = por %p157, %p158
      %p160 = scmp.ne.s32.totalorder %s146, %s147
      %p161 = scmp.eq.s32.totalorder %s24, 1
      %p162 = por %p160, %p161
      %p164 = scmp.ne.s32.totalorder %s147, %s163
      %p165 = scmp.eq.s32.totalorder %s24, 0
      %p166 = por %p164, %p165
      %s168 = sadd.s32 %s167, 1
      %p171 = scmp.eq.s32.totalorder %s18, 1
      %p172 = scmp.ne.s32.totalorder %s167, %s169
      %p173 = scmp.eq.s32.totalorder %s18, 0
      %p174 = por %p172, %p173
      %p175 = scmp.ne.s32.totalorder %s167, %s169
      %p176 = scmp.eq.s32.totalorder %s23, 1
      %p177 = por %p175, %p176
      %p178 = scmp.ne.s32.totalorder %s169, %s170
      %p179 = scmp.eq.s32.totalorder %s23, 0
      %p180 = por %p178, %p179
      %p181 = scmp.ne.s32.totalorder %s169, %s170
      %p182 = scmp.eq.s32.totalorder %s24, 1
      %p183 = por %p181, %p182
      %p185 = scmp.ne.s32.totalorder %s170, %s184
      %p186 = scmp.eq.s32.totalorder %s24, 0
      %p187 = por %p185, %p186
      %s188 = ssub.s32 %s18, %s25
      %p189 = scmp.eq.s32.totalorder %s188, 0
      %s191 = sadd.s32 %s190, 1
      %s192 = scalar_select %p189, %s190, %s191
      %p195 = pneg %p189
      %p196 = scmp.eq.s32.totalorder %s18, 1
      %p197 = por %p195, %p196
      %p198 = scmp.ne.s32.totalorder %s190, %s193
      %p199 = scmp.eq.s32.totalorder %s18, 0
      %p200 = por %p198, %p199
      %p201 = scmp.ne.s32.totalorder %s190, %s193
      %p202 = scmp.eq.s32.totalorder %s23, 1
      %p203 = por %p201, %p202
      %p204 = scmp.ne.s32.totalorder %s193, %s194
      %p205 = scmp.eq.s32.totalorder %s23, 0
      %p206 = por %p204, %p205
      %p207 = scmp.ne.s32.totalorder %s193, %s194
      %p208 = scmp.eq.s32.totalorder %s24, 1
      %p209 = por %p207, %p208
      %p211 = scmp.ne.s32.totalorder %s194, %s210
      %p212 = scmp.eq.s32.totalorder %s24, 0
      %p213 = por %p211, %p212
      %p214 = scmp.le.s32.totalorder 1, %s18
      %p215 = scmp.lt.s32.totalorder %s18, 3
      %p216 = pnand %p214, %p215
      %p217 = pneg %p216
      // Predicated region
      $region9: #{tpu_custom_call.1} parent=5 // pred_check
        _
      $region10: #{tpu_custom_call.1} parent=5 // pred_check_branch
        %219 = sbr.rel (%p216) target = $region12
      $region11: #{tpu_custom_call.1} parent=5 // pred_region
        %s220 = ssub.s32 %s18, 1
        // Predicated region
        $region13: #{tpu_custom_call.1} parent=11 // pred_check
          %p221 = pneg %p91
        $region14: #{tpu_custom_call.1} parent=11 // pred_check_branch
          %223 = sbr.rel (%p221) target = $region16
        $region15: #{tpu_custom_call.1} parent=11 // pred_region
          %s225 = ssub.s32 2048, 2048
          %226 = vsyncadd [#allocation3], %s225
          %s227 = sshll.u32 [#allocation2], 4
          %s228 = int_to_ptr.vmem [resolvable:$true] %s227
          %233 = dma.hbm_to_vmem [thread:$0]  %s2, 2048, %s228, [#allocation3], 128, 128, 8
        $region16: #{tpu_custom_call.1} parent=11 // pred_fallthru
          _
        // Predicated region
        $region17: #{tpu_custom_call.1} parent=11 // pred_check
          %p234 = pneg %p112
        $region18: #{tpu_custom_call.1} parent=11 // pred_check_branch
          %236 = sbr.rel (%p234) target = $region20
        $region19: #{tpu_custom_call.1} parent=11 // pred_region
          _
        $region20: #{tpu_custom_call.1} parent=11 // pred_fallthru
          _
        // Predicated region
        $region21: #{tpu_custom_call.1} parent=11 // pred_check
          %p237 = pneg %p133
        $region22: #{tpu_custom_call.1} parent=11 // pred_check_branch
          %239 = sbr.rel (%p237) target = $region24
        $region23: #{tpu_custom_call.1} parent=11 // pred_region
          _
        $region24: #{tpu_custom_call.1} parent=11 // pred_fallthru
          _
        // Predicated region
        $region25: #{tpu_custom_call.1} parent=11 // pred_check
          %p240 = pneg %p180
        $region26: #{tpu_custom_call.1} parent=11 // pred_check_branch
          %242 = sbr.rel (%p240) target = $region28
        $region27: #{tpu_custom_call.1} parent=11 // pred_region
          %s244 = ssub.s32 2048, 2048
          %245 = vsyncadd [#allocation6], %s244
          %s246 = sshll.u32 [#allocation5], 4
          %s247 = int_to_ptr.vmem [resolvable:$true] %s246
          %252 = dma.hbm_to_vmem [thread:$0]  %s6, 2048, %s247, [#allocation6], 64, 64, 4
        $region28: #{tpu_custom_call.1} parent=11 // pred_fallthru
          _
      $region12: #{tpu_custom_call.1} parent=5 // pred_fallthru
        _
      %p253 = scmp.lt.s32.totalorder %s18, 2
      // Predicated region
      $region29: #{tpu_custom_call.1} parent=5 // pred_check
        %p254 = pneg %p253
      $region30: #{tpu_custom_call.1} parent=5 // pred_check_branch
        %256 = sbr.rel (%p254) target = $region32
      $region31: #{tpu_custom_call.1} parent=5 // pred_region
        // Predicated region
        $region33: #{tpu_custom_call.1} parent=31 // pred_check
          %p257 = pneg %p38
        $region34: #{tpu_custom_call.1} parent=31 // pred_check_branch
          %259 = sbr.rel (%p257) target = $region36
        $region35: #{tpu_custom_call.1} parent=31 // pred_region
          %s260 = smul.u32 4, %s18
          %p261 = scmp.lt.s32.totalorder %s260, 7
          %s262 = scalar_select %p261, %s260, 7
          %s263 = smul.addr %s262, 4
          %s264 = scalar_lea.vmem %s0, %s263
          %s265 = smul.u32 4, %s18
        $region36: #{tpu_custom_call.1} parent=31 // pred_fallthru
          _
        // Predicated region
        $region37: #{tpu_custom_call.1} parent=31 // pred_check
          %p266 = pneg %p64
        $region38: #{tpu_custom_call.1} parent=31 // pred_check_branch
          %268 = sbr.rel (%p266) target = $region40
        $region39: #{tpu_custom_call.1} parent=31 // pred_region
          %s269 = smul.u32 4, %s18
          %p270 = scmp.lt.s32.totalorder %s269, 7
          %s271 = scalar_select %p270, %s269, 7
          %s272 = smul.addr %s271, 8
          %s273 = scalar_lea.vmem %s1, %s272
          %s274 = smul.u32 4, %s18
        $region40: #{tpu_custom_call.1} parent=31 // pred_fallthru
          _
        // Predicated region
        $region41: #{tpu_custom_call.1} parent=31 // pred_check
          %p275 = pneg %p153
        $region42: #{tpu_custom_call.1} parent=31 // pred_check_branch
          %277 = sbr.rel (%p275) target = $region44
        $region43: #{tpu_custom_call.1} parent=31 // pred_region
          %p278 = scmp.lt.s32.totalorder %s18, 1
          %s279 = scalar_select %p278, %s18, 1
          %s280 = smul.addr %s279, 2
          %s281 = smul.addr %s280, 8
          %s282 = scalar_lea.vmem %s5, %s281
        $region44: #{tpu_custom_call.1} parent=31 // pred_fallthru
          _
      $region32: #{tpu_custom_call.1} parent=5 // pred_fallthru
        _
      %p283 = scmp.le.s32.totalorder 1, %s18
      %p284 = scmp.lt.s32.totalorder %s18, 3
      %p285 = pnand %p283, %p284
      %p286 = pneg %p285
      // Predicated region
      $region45: #{tpu_custom_call.1} parent=5 // pred_check
        _
      $region46: #{tpu_custom_call.1} parent=5 // pred_check_branch
        %288 = sbr.rel (%p285) target = $region48
      $region47: #{tpu_custom_call.1} parent=5 // pred_region
        %s289 = ssub.s32 %s18, 1
        // Predicated region
        $region49: #{tpu_custom_call.1} parent=47 // pred_check
          %p290 = pneg %p91
        $region50: #{tpu_custom_call.1} parent=47 // pred_check_branch
          %292 = sbr.rel (%p290) target = $region52
        $region51: #{tpu_custom_call.1} parent=47 // pred_region
          %293 = dma.done [#allocation3], 2048
        $region52: #{tpu_custom_call.1} parent=47 // pred_fallthru
          _
        // Predicated region
        $region53: #{tpu_custom_call.1} parent=47 // pred_check
          %p294 = pneg %p180
        $region54: #{tpu_custom_call.1} parent=47 // pred_check_branch
          %296 = sbr.rel (%p294) target = $region56
        $region55: #{tpu_custom_call.1} parent=47 // pred_region
          %297 = dma.done [#allocation6], 2048
        $region56: #{tpu_custom_call.1} parent=47 // pred_fallthru
          _
        %s298 = smul.u32 4, %s23
        %p299 = scmp.lt.s32.totalorder %s298, 7
        %s300 = scalar_select %p299, %s298, 7
        %s301 = smul.addr %s300, 4
        %s302 = scalar_lea.vmem %s0, %s301
        %p303 = pneg %p44
        %p304 = pneg %p41
        %s305 = smul.u32 4, %s23
        %p306 = scmp.lt.s32.totalorder %s305, 7
        %s307 = scalar_select %p306, %s305, 7
        %s308 = smul.addr %s307, 8
        %s309 = scalar_lea.vmem %s1, %s308
        %p310 = pneg %p70
        %p311 = pneg %p67
        %p312 = pneg %p91
        %p313 = pneg %p88
        %p314 = pneg %p112
        %p315 = pneg %p109
        %p316 = pneg %p133
        %p317 = pneg %p130
        %p318 = scmp.lt.s32.totalorder %s23, 1
        %s319 = scalar_select %p318, %s23, 1
        %s320 = smul.addr %s319, 2
        %s321 = smul.addr %s320, 8
        %s322 = scalar_lea.vmem %s5, %s321
        %p323 = pneg %p159
        %p324 = pneg %p156
        %p325 = pneg %p180
        %p326 = pneg %p177
        %p327 = pneg %p206
        %p328 = pneg %p203
        %s329 = sand.u32 %s193, 1
        %s330 = scalar_lea.sflag [#allocation4], %s329
        %s331 = sand.u32 %s193, 1
        %s332 = smul.addr %s331, 32
        %s333 = scalar_lea.vmem [#allocation7], %s332
        %s334 = smul.u32 4, %s23
        %p335 = scmp.lt.s32.totalorder %s334, 7
        %s336 = scalar_select %p335, %s334, 7
        %s337 = smul.addr %s336, 4
        %s338 = scalar_lea.vmem %s0, %s337
        %s339 = smul.u32 4, %s23
        %s340 = smul.u32 4, %s23
        %p341 = scmp.lt.s32.totalorder %s340, 7
        %s342 = scalar_select %p341, %s340, 7
        %s343 = smul.addr %s342, 8
        %s344 = scalar_lea.vmem %s1, %s343
        %s345 = smul.u32 4, %s23
        %p346 = scmp.lt.s32.totalorder %s23, 1
        %s347 = scalar_select %p346, %s23, 1
        %s348 = smul.addr %s347, 2
        %s349 = smul.addr %s348, 8
        %s350 = scalar_lea.vmem %s5, %s349
        %s351 = smul.u32 4, %s23
        %v353 = vld [vmem:[%s338] sm:$0xf]
        %v354 = vld [vmem:[%s338 + $0x4] sm:$0xf]
        %v355 = vld [vmem:[%s338 + $0x8] sm:$0xf]
        %v356 = vld [vmem:[%s338 + $0xc] sm:$0xf]
        %v357 = vld [vmem:[#allocation2] sm:$0xff]
        %v358 = vld [vmem:[#allocation2 + $0x8] sm:$0xff]
        %v359 = vld [vmem:[#allocation2 + $0x10] sm:$0xff]
        %v360 = vld [vmem:[#allocation2 + $0x18] sm:$0xff]
        %v361 = vld [vmem:[#allocation2 + $0x20] sm:$0xff]
        %v362 = vld [vmem:[#allocation2 + $0x28] sm:$0xff]
        %v363 = vld [vmem:[#allocation2 + $0x30] sm:$0xff]
        %v364 = vld [vmem:[#allocation2 + $0x38] sm:$0xff]
        %v365 = vld [vmem:[#allocation2 + $0x40] sm:$0xff]
        %v366 = vld [vmem:[#allocation2 + $0x48] sm:$0xff]
        %v367 = vld [vmem:[#allocation2 + $0x50] sm:$0xff]
        %v368 = vld [vmem:[#allocation2 + $0x58] sm:$0xff]
        %v369 = vld [vmem:[#allocation2 + $0x60] sm:$0xff]
        %v370 = vld [vmem:[#allocation2 + $0x68] sm:$0xff]
        %v371 = vld [vmem:[#allocation2 + $0x70] sm:$0xff]
        %v372 = vld [vmem:[#allocation2 + $0x78] sm:$0xff]
        %v377 = vunpack.c.l.b16 %v353
        %v378 = vunpack.c.l.b16 %v354
        %v379 = vunpack.c.l.b16 %v355
        %v380 = vunpack.c.l.b16 %v356
        %v381 = vpack.c.b16 %v378, %v377
        %v382 = vpack.c.b16 %v380, %v379
        %v401 = vunpack.c.l.b16 %v357
        %v402 = vunpack.c.h.b16 %v357
        %v403 = vunpack.c.l.b16 %v358
        %v404 = vunpack.c.h.b16 %v358
        %v405 = vunpack.c.l.b16 %v359
        %v406 = vunpack.c.h.b16 %v359
        %v407 = vunpack.c.l.b16 %v360
        %v408 = vunpack.c.h.b16 %v360
        %v409 = vunpack.c.l.b16 %v361
        %v410 = vunpack.c.h.b16 %v361
        %v411 = vunpack.c.l.b16 %v362
        %v412 = vunpack.c.h.b16 %v362
        %v413 = vunpack.c.l.b16 %v363
        %v414 = vunpack.c.h.b16 %v363
        %v415 = vunpack.c.l.b16 %v364
        %v416 = vunpack.c.h.b16 %v364
        %v417 = vunpack.c.l.b16 %v365
        %v418 = vunpack.c.h.b16 %v365
        %v419 = vunpack.c.l.b16 %v366
        %v420 = vunpack.c.h.b16 %v366
        %v421 = vunpack.c.l.b16 %v367
        %v422 = vunpack.c.h.b16 %v367
        %v423 = vunpack.c.l.b16 %v368
        %v424 = vunpack.c.h.b16 %v368
        %v425 = vunpack.c.l.b16 %v369
        %v426 = vunpack.c.h.b16 %v369
        %v427 = vunpack.c.l.b16 %v370
        %v428 = vunpack.c.h.b16 %v370
        %v429 = vunpack.c.l.b16 %v371
        %v430 = vunpack.c.h.b16 %v371
        %v431 = vunpack.c.l.b16 %v372
        %v432 = vunpack.c.h.b16 %v372
        %v433 = vpack.c.b16 %v403, %v401
        %v434 = vpack.c.b16 %v404, %v402
        %v435 = vpack.c.b16 %v407, %v405
        %v436 = vpack.c.b16 %v408, %v406
        %v437 = vpack.c.b16 %v411, %v409
        %v438 = vpack.c.b16 %v412, %v410
        %v439 = vpack.c.b16 %v415, %v413
        %v440 = vpack.c.b16 %v416, %v414
        %v441 = vpack.c.b16 %v419, %v417
        %v442 = vpack.c.b16 %v420, %v418
        %v443 = vpack.c.b16 %v423, %v421
        %v444 = vpack.c.b16 %v424, %v422
        %v445 = vpack.c.b16 %v427, %v425
        %v446 = vpack.c.b16 %v428, %v426
        %v447 = vpack.c.b16 %v431, %v429
        %v448 = vpack.c.b16 %v432, %v430
        %465 = vmatprep.subr.bf16.mxu0 %v434
        %466 = vmatpush1.bf16.msra.mxu0 %v433
        %467 = vmatprep.subr.bf16.mxu0 %v436
        %468 = vmatpush1.bf16.msra.mxu0 %v435
        %469 = vmatprep.subr.bf16.mxu0 %v438
        %470 = vmatpush1.bf16.msra.mxu0 %v437
        %471 = vmatprep.subr.bf16.mxu0 %v440
        %472 = vmatpush1.bf16.msra.mxu0 %v439
        %473 = vmatprep.subr.bf16.mxu0 %v442
        %474 = vmatpush1.bf16.msra.mxu0 %v441
        %475 = vmatprep.subr.bf16.mxu0 %v444
        %476 = vmatpush1.bf16.msra.mxu0 %v443
        %477 = vmatprep.subr.bf16.mxu0 %v446
        %478 = vmatpush1.bf16.msra.mxu0 %v445
        %479 = vmatprep.subr.bf16.mxu0 %v448
        %480 = vmatpush1.bf16.msra.mxu0 %v447
        %481 = vmatprep.subr.bf16.mxu0 0
        %482 = vmatpush1.bf16.msra.mxu0 0
        %483 = vmatprep.subr.bf16.mxu0 0
        %484 = vmatpush1.bf16.msra.mxu0 0
        %485 = vmatprep.subr.bf16.mxu0 0
        %486 = vmatpush1.bf16.msra.mxu0 0
        %487 = vmatprep.subr.bf16.mxu0 0
        %488 = vmatpush1.bf16.msra.mxu0 0
        %489 = vmatprep.subr.bf16.mxu0 0
        %490 = vmatpush1.bf16.msra.mxu0 0
        %491 = vmatprep.subr.bf16.mxu0 0
        %492 = vmatpush1.bf16.msra.mxu0 0
        %493 = vmatprep.subr.bf16.mxu0 0
        %494 = vmatpush1.bf16.msra.mxu0 0
        %495 = vmatprep.subr.bf16.mxu0 0
        %496 = vmatpush1.bf16.msra.mxu0 0
        %497 = vmatprep.mubr.bf16.mxu0 0
        %498 = vmatmul.mubr.bf16.gmra.mrb[0].mxu0 %v381
        %v499 = vpop.f32.mrb[0].mxu0
        %v500 = vadd.f32 0.0, %v499
        %v501 = vpop.f32.mrb[0].mxu0
        %v502 = vadd.f32 0.0, %v501
        %v503 = vpop.f32.mrb[0].mxu0
        %v504 = vadd.f32 0.0, %v503
        %v505 = vpop.f32.mrb[0].mxu0
        %v506 = vadd.f32 0.0, %v505
        %507 = vmatprep.mubr.bf16.mxu0 0
        %508 = vmatmul.mubr.bf16.gmra.mrb[0].mxu0 %v382
        %v509 = vpop.f32.mrb[0].mxu0
        %v510 = vadd.f32 0.0, %v509
        %v511 = vpop.f32.mrb[0].mxu0
        %v512 = vadd.f32 0.0, %v511
        %v513 = vpop.f32.mrb[0].mxu0
        %v514 = vadd.f32 0.0, %v513
        %v515 = vpop.f32.mrb[0].mxu0
        %v516 = vadd.f32 0.0, %v515
        %517 = vdwg.mxu0
        %v518 = vld [vmem:[%s344] sm:$0xff]
        %v519 = vld [vmem:[%s344 + $0x8] sm:$0xff]
        %v520 = vld [vmem:[%s344 + $0x10] sm:$0xff]
        %v521 = vld [vmem:[%s344 + $0x18] sm:$0xff]
        %523 = vset.pattern.permute.xlu0 0
        %524 = vperm.xlu0 %523, %v518
        %v525 = vpop.permute.xlu0 %524
        %528 = vset.pattern.permute.xlu0 0
        %529 = vperm.xlu0 %528, %v519
        %v530 = vpop.permute.xlu0 %529
        %533 = vset.pattern.permute.xlu0 0
        %534 = vperm.xlu0 %533, %v520
        %v535 = vpop.permute.xlu0 %534
        %538 = vset.pattern.permute.xlu0 0
        %539 = vperm.xlu0 %538, %v521
        %v540 = vpop.permute.xlu0 %539
        %v542 = vsub.f32 %v500, %v525
        %v543 = vsub.f32 %v502, %v525
        %v544 = vsub.f32 %v504, %v530
        %v545 = vsub.f32 %v506, %v530
        %v546 = vsub.f32 %v510, %v535
        %v547 = vsub.f32 %v512, %v535
        %v548 = vsub.f32 %v514, %v540
        %v549 = vsub.f32 %v516, %v540
        %v550 = vld [vmem:[%s3] sm:$0x3]
        %v552 = vlaneseq
        %v553 = vshrl.u32 %v552, 7
        %v554 = vsub.s32 0, %v553
        %v555 = vrot.slane %v550, %v554
        %v556 = vlaneseq
        %v557 = vshrl.u32 %v556, 7
        %v558 = vsub.s32 1, %v557
        %v559 = vrot.slane %v550, %v558
        %v562 = vsub.f32 %v542, %v555
        %v563 = vsub.f32 %v543, %v559
        %v564 = vsub.f32 %v544, %v555
        %v565 = vsub.f32 %v545, %v559
        %v566 = vsub.f32 %v546, %v555
        %v567 = vsub.f32 %v547, %v559
        %v568 = vsub.f32 %v548, %v555
        %v569 = vsub.f32 %v549, %v559
        %v570 = vmin.f32 %v562, 0.0
        %v571 = vmin.f32 %v563, 0.0
        %v572 = vmin.f32 %v564, 0.0
        %v573 = vmin.f32 %v565, 0.0
        %v574 = vmin.f32 %v566, 0.0
        %v575 = vmin.f32 %v567, 0.0
        %v576 = vmin.f32 %v568, 0.0
        %v577 = vmin.f32 %v569, 0.0
        %v578 = vld [vmem:[%s4] sm:$0x3]
        %v580 = vlaneseq
        %v581 = vshrl.u32 %v580, 7
        %v582 = vsub.s32 0, %v581
        %v583 = vrot.slane %v578, %v582
        %v584 = vlaneseq
        %v585 = vshrl.u32 %v584, 7
        %v586 = vsub.s32 1, %v585
        %v587 = vrot.slane %v578, %v586
        %v590 = vadd.f32 %v570, %v583
        %v591 = vadd.f32 %v571, %v587
        %v592 = vadd.f32 %v572, %v583
        %v593 = vadd.f32 %v573, %v587
        %v594 = vadd.f32 %v574, %v583
        %v595 = vadd.f32 %v575, %v587
        %v596 = vadd.f32 %v576, %v583
        %v597 = vadd.f32 %v577, %v587
        %v598 = vmul.f32 %v590, 1.442695
        %v599 = vpow.pop %v598
        %v600 = vmul.f32 %v591, 1.442695
        %v601 = vpow.pop %v600
        %v602 = vmul.f32 %v592, 1.442695
        %v603 = vpow.pop %v602
        %v604 = vmul.f32 %v593, 1.442695
        %v605 = vpow.pop %v604
        %v606 = vmul.f32 %v594, 1.442695
        %v607 = vpow.pop %v606
        %v608 = vmul.f32 %v595, 1.442695
        %v609 = vpow.pop %v608
        %v610 = vmul.f32 %v596, 1.442695
        %v611 = vpow.pop %v610
        %v612 = vmul.f32 %v597, 1.442695
        %v613 = vpow.pop %v612
        %v614 = vld [vmem:[%s350] sm:$0xff]
        %v615 = vld [vmem:[%s350 + $0x8] sm:$0xff]
        %v616 = vunpack.c.0.s8 %v614
        %v617 = vunpack.c.0.s8 %v615
        %v618 = vunpack.c.1.s8 %v614
        %v619 = vunpack.c.1.s8 %v615
        %v620 = vunpack.c.2.s8 %v614
        %v621 = vunpack.c.2.s8 %v615
        %v622 = vunpack.c.3.s8 %v614
        %v623 = vunpack.c.3.s8 %v615
        %v624 = vcvt.s32.f32 %v616
        %v625 = vcvt.s32.f32 %v617
        %v626 = vcvt.s32.f32 %v618
        %v627 = vcvt.s32.f32 %v619
        %v628 = vcvt.s32.f32 %v620
        %v629 = vcvt.s32.f32 %v621
        %v630 = vcvt.s32.f32 %v622
        %v631 = vcvt.s32.f32 %v623
        %v632 = vmul.f32 %v599, %v624
        %v633 = vmul.f32 %v601, %v625
        %v634 = vmul.f32 %v603, %v626
        %v635 = vmul.f32 %v605, %v627
        %v636 = vmul.f32 %v607, %v628
        %v637 = vmul.f32 %v609, %v629
        %v638 = vmul.f32 %v611, %v630
        %v639 = vmul.f32 %v613, %v631
        %v640 = vpack.c.bf16 %v634, %v632
        %v641 = vpack.c.bf16 %v635, %v633
        %v642 = vpack.c.bf16 %v638, %v636
        %v643 = vpack.c.bf16 %v639, %v637
        %v644 = vld [vmem:[#allocation5] sm:$0xf]
        %v645 = vld [vmem:[#allocation5 + $0x4] sm:$0xf]
        %v646 = vld [vmem:[#allocation5 + $0x8] sm:$0xf]
        %v647 = vld [vmem:[#allocation5 + $0xc] sm:$0xf]
        %v648 = vld [vmem:[#allocation5 + $0x10] sm:$0xf]
        %v649 = vld [vmem:[#allocation5 + $0x14] sm:$0xf]
        %v650 = vld [vmem:[#allocation5 + $0x18] sm:$0xf]
        %v651 = vld [vmem:[#allocation5 + $0x1c] sm:$0xf]
        %v652 = vld [vmem:[#allocation5 + $0x20] sm:$0xf]
        %v653 = vld [vmem:[#allocation5 + $0x24] sm:$0xf]
        %v654 = vld [vmem:[#allocation5 + $0x28] sm:$0xf]
        %v655 = vld [vmem:[#allocation5 + $0x2c] sm:$0xf]
        %v656 = vld [vmem:[#allocation5 + $0x30] sm:$0xf]
        %v657 = vld [vmem:[#allocation5 + $0x34] sm:$0xf]
        %v658 = vld [vmem:[#allocation5 + $0x38] sm:$0xf]
        %v659 = vld [vmem:[#allocation5 + $0x3c] sm:$0xf]
        %v660 = vld [vmem:[#allocation5 + $0x40] sm:$0xf]
        %v661 = vld [vmem:[#allocation5 + $0x44] sm:$0xf]
        %v662 = vld [vmem:[#allocation5 + $0x48] sm:$0xf]
        %v663 = vld [vmem:[#allocation5 + $0x4c] sm:$0xf]
        %v664 = vld [vmem:[#allocation5 + $0x50] sm:$0xf]
        %v665 = vld [vmem:[#allocation5 + $0x54] sm:$0xf]
        %v666 = vld [vmem:[#allocation5 + $0x58] sm:$0xf]
        %v667 = vld [vmem:[#allocation5 + $0x5c] sm:$0xf]
        %v668 = vld [vmem:[#allocation5 + $0x60] sm:$0xf]
        %v669 = vld [vmem:[#allocation5 + $0x64] sm:$0xf]
        %v670 = vld [vmem:[#allocation5 + $0x68] sm:$0xf]
        %v671 = vld [vmem:[#allocation5 + $0x6c] sm:$0xf]
        %v672 = vld [vmem:[#allocation5 + $0x70] sm:$0xf]
        %v673 = vld [vmem:[#allocation5 + $0x74] sm:$0xf]
        %v674 = vld [vmem:[#allocation5 + $0x78] sm:$0xf]
        %v675 = vld [vmem:[#allocation5 + $0x7c] sm:$0xf]
        %v708 = vunpack.c.l.b16 %v644
        %v709 = vunpack.c.l.b16 %v645
        %v710 = vunpack.c.l.b16 %v646
        %v711 = vunpack.c.l.b16 %v647
        %v712 = vunpack.c.l.b16 %v648
        %v713 = vunpack.c.l.b16 %v649
        %v714 = vunpack.c.l.b16 %v650
        %v715 = vunpack.c.l.b16 %v651
        %v716 = vunpack.c.l.b16 %v652
        %v717 = vunpack.c.l.b16 %v653
        %v718 = vunpack.c.l.b16 %v654
        %v719 = vunpack.c.l.b16 %v655
        %v720 = vunpack.c.l.b16 %v656
        %v721 = vunpack.c.l.b16 %v657
        %v722 = vunpack.c.l.b16 %v658
        %v723 = vunpack.c.l.b16 %v659
        %v724 = vunpack.c.l.b16 %v660
        %v725 = vunpack.c.l.b16 %v661
        %v726 = vunpack.c.l.b16 %v662
        %v727 = vunpack.c.l.b16 %v663
        %v728 = vunpack.c.l.b16 %v664
        %v729 = vunpack.c.l.b16 %v665
        %v730 = vunpack.c.l.b16 %v666
        %v731 = vunpack.c.l.b16 %v667
        %v732 = vunpack.c.l.b16 %v668
        %v733 = vunpack.c.l.b16 %v669
        %v734 = vunpack.c.l.b16 %v670
        %v735 = vunpack.c.l.b16 %v671
        %v736 = vunpack.c.l.b16 %v672
        %v737 = vunpack.c.l.b16 %v673
        %v738 = vunpack.c.l.b16 %v674
        %v739 = vunpack.c.l.b16 %v675
        %v740 = vpack.c.b16 %v709, %v708
        %v741 = vpack.c.b16 %v711, %v710
        %v742 = vpack.c.b16 %v713, %v712
        %v743 = vpack.c.b16 %v715, %v714
        %v744 = vpack.c.b16 %v717, %v716
        %v745 = vpack.c.b16 %v719, %v718
        %v746 = vpack.c.b16 %v721, %v720
        %v747 = vpack.c.b16 %v723, %v722
        %v748 = vpack.c.b16 %v725, %v724
        %v749 = vpack.c.b16 %v727, %v726
        %v750 = vpack.c.b16 %v729, %v728
        %v751 = vpack.c.b16 %v731, %v730
        %v752 = vpack.c.b16 %v733, %v732
        %v753 = vpack.c.b16 %v735, %v734
        %v754 = vpack.c.b16 %v737, %v736
        %v755 = vpack.c.b16 %v739, %v738
        %772 = vmatprep.subr.bf16.mxu0 0
        %773 = vmatpush1.bf16.msra.mxu0 %v740
        %774 = vmatprep.subr.bf16.mxu0 0
        %775 = vmatpush1.bf16.msra.mxu0 %v741
        %776 = vmatprep.subr.bf16.mxu0 0
        %777 = vmatpush1.bf16.msra.mxu0 %v742
        %778 = vmatprep.subr.bf16.mxu0 0
        %779 = vmatpush1.bf16.msra.mxu0 %v743
        %780 = vmatprep.subr.bf16.mxu0 0
        %781 = vmatpush1.bf16.msra.mxu0 %v744
        %782 = vmatprep.subr.bf16.mxu0 0
        %783 = vmatpush1.bf16.msra.mxu0 %v745
        %784 = vmatprep.subr.bf16.mxu0 0
        %785 = vmatpush1.bf16.msra.mxu0 %v746
        %786 = vmatprep.subr.bf16.mxu0 0
        %787 = vmatpush1.bf16.msra.mxu0 %v747
        %788 = vmatprep.subr.bf16.mxu0 0
        %789 = vmatpush1.bf16.msra.mxu0 %v748
        %790 = vmatprep.subr.bf16.mxu0 0
        %791 = vmatpush1.bf16.msra.mxu0 %v749
        %792 = vmatprep.subr.bf16.mxu0 0
        %793 = vmatpush1.bf16.msra.mxu0 %v750
        %794 = vmatprep.subr.bf16.mxu0 0
        %795 = vmatpush1.bf16.msra.mxu0 %v751
        %796 = vmatprep.subr.bf16.mxu0 0
        %797 = vmatpush1.bf16.msra.mxu0 %v752
        %798 = vmatprep.subr.bf16.mxu0 0
        %799 = vmatpush1.bf16.msra.mxu0 %v753
        %800 = vmatprep.subr.bf16.mxu0 0
        %801 = vmatpush1.bf16.msra.mxu0 %v754
        %802 = vmatprep.subr.bf16.mxu0 0
        %803 = vmatpush1.bf16.msra.mxu0 %v755
        %804 = vmatprep.mubr.bf16.mxu0 %v641
        %805 = vmatmul.mubr.bf16.gmra.mrb[0].mxu0 %v640
        %v806 = vpop.f32.mrb[0].mxu0
        %v807 = vadd.f32 0.0, %v806
        %v808 = vpop.f32.mrb[0].mxu0
        %v809 = vpop.f32.mrb[0].mxu0
        %v810 = vadd.f32 0.0, %v809
        %v811 = vpop.f32.mrb[0].mxu0
        %812 = vmatprep.mubr.bf16.mxu0 %v643
        %813 = vmatmul.mubr.bf16.gmra.mrb[0].mxu0 %v642
        %v814 = vpop.f32.mrb[0].mxu0
        %v815 = vadd.f32 0.0, %v814
        %v816 = vpop.f32.mrb[0].mxu0
        %v817 = vpop.f32.mrb[0].mxu0
        %v818 = vadd.f32 0.0, %v817
        %v819 = vpop.f32.mrb[0].mxu0
        %820 = vdwg.mxu0
        %v821 = vlaneseq
        %v822 = vand.u32 %v821, 127
        %vm823 = vcmp.lt.s32.totalorder %v822, 4
        %vm824 = vcmp.eq.f32.partialorder %v807, 0.0
        %vm825 = vcmp.eq.f32.partialorder %v810, 0.0
        %vm826 = vcmp.eq.f32.partialorder %v815, 0.0
        %vm827 = vcmp.eq.f32.partialorder %v818, 0.0
        %vm828 = vmand %vm823, %vm824
        %vm829 = vmand %vm823, %vm825
        %vm830 = vmand %vm823, %vm826
        %vm831 = vmand %vm823, %vm827
        %v832 = vsel %vm828, 1e-10, %v807
        %v833 = vsel %vm829, 1e-10, %v810
        %v834 = vsel %vm830, 1e-10, %v815
        %v835 = vsel %vm831, 1e-10, %v818
        %836 = vadd.xlane.f32.xlu0 %v832
        %v837 = vpop.xlane.xlu0 %836
        %838 = vadd.xlane.f32.xlu0 %v833
        %v839 = vpop.xlane.xlu0 %838
        %840 = vadd.xlane.f32.xlu0 %v834
        %v841 = vpop.xlane.xlu0 %840
        %842 = vadd.xlane.f32.xlu0 %v835
        %v843 = vpop.xlane.xlu0 %842
        %v844 = vrcp.pop %v837
        %v845 = vrcp.pop %v839
        %v846 = vrcp.pop %v841
        %v847 = vrcp.pop %v843
        %v848 = vmul.f32 %v832, %v844
        %v849 = vmul.f32 %v833, %v845
        %v850 = vmul.f32 %v834, %v846
        %v851 = vmul.f32 %v835, %v847
        %v852 = vsel %vm823, %v848, 1.0
        %v853 = vsel %vm823, %v849, 1.0
        %v854 = vsel %vm823, %v850, 1.0
        %v855 = vsel %vm823, %v851, 1.0
        %v856 = vlog2.pop %v852
        %v857 = vmul.f32 %v856, 0.6931472
        %v858 = vlog2.pop %v853
        %v859 = vmul.f32 %v858, 0.6931472
        %v860 = vlog2.pop %v854
        %v861 = vmul.f32 %v860, 0.6931472
        %v862 = vlog2.pop %v855
        %v863 = vmul.f32 %v862, 0.6931472
        %864 = vrot.lane.b32.xlu0 %v848, 4
        %v865 = vpop.permute.xlu0 %864
        %866 = vrot.lane.b32.xlu0 %v849, 4
        %v867 = vpop.permute.xlu0 %866
        %868 = vrot.lane.b32.xlu0 %v850, 4
        %v869 = vpop.permute.xlu0 %868
        %870 = vrot.lane.b32.xlu0 %v851, 4
        %v871 = vpop.permute.xlu0 %870
        %v872 = vadd.f32 %v857, %v865
        %v873 = vadd.f32 %v859, %v867
        %v874 = vadd.f32 %v861, %v869
        %v875 = vadd.f32 %v863, %v871
        %876 = vst [vmem:[%s333] sm:$0xff] %v872
        %877 = vst [vmem:[%s333 + $0x8] sm:$0xff] %v873
        %878 = vst [vmem:[%s333 + $0x10] sm:$0xff] %v874
        %879 = vst [vmem:[%s333 + $0x18] sm:$0xff] %v875
        %s880 = sand.u32 %s193, 1
        %s881 = scalar_lea.sflag [#allocation4], %s880
        %s882 = sand.u32 %s193, 1
        %s883 = smul.addr %s882, 32
        %s884 = scalar_lea.vmem [#allocation7], %s883
        // Predicated region
        $region57: #{tpu_custom_call.1} parent=47 // pred_check
          %p885 = pneg %p203
        $region58: #{tpu_custom_call.1} parent=47 // pred_check_branch
          %887 = sbr.rel (%p885) target = $region60
        $region59: #{tpu_custom_call.1} parent=47 // pred_region
          %s888 = smul.u32 4, %s23
          %s890 = ssub.s32 512, 512
          %891 = vsyncadd %s881, %s890
          %s892 = smul.addr %s888, 128
          %s893 = scalar_lea.hbm %s7, %s892
          %s894 = sshll.u32 %s884, 4
          %s895 = int_to_ptr.vmem [resolvable:$true] %s894
          %900 = dma.vmem_to_hbm [thread:$0]  %s895, 512, %s893, %s881, 128, 128, 8
        $region60: #{tpu_custom_call.1} parent=47 // pred_fallthru
          _
      $region48: #{tpu_custom_call.1} parent=5 // pred_fallthru
        _
      %p901 = scmp.le.s32.totalorder 2, %s18
      // Predicated region
      $region61: #{tpu_custom_call.1} parent=5 // pred_check
        %p902 = pneg %p901
      $region62: #{tpu_custom_call.1} parent=5 // pred_check_branch
        %904 = sbr.rel (%p902) target = $region64
      $region63: #{tpu_custom_call.1} parent=5 // pred_region
        %s905 = ssub.s32 %s18, 2
        // Predicated region
        $region65: #{tpu_custom_call.1} parent=63 // pred_check
          %p906 = pneg %p209
        $region66: #{tpu_custom_call.1} parent=63 // pred_check_branch
          %908 = sbr.rel (%p906) target = $region68
        $region67: #{tpu_custom_call.1} parent=63 // pred_region
          %s909 = sand.u32 %s194, 1
          %s910 = scalar_lea.sflag [#allocation4], %s909
          %s911 = sand.u32 %s194, 1
          %s912 = smul.addr %s911, 32
          %s913 = scalar_lea.vmem [#allocation7], %s912
          %914 = dma.done %s910, 512
        $region68: #{tpu_custom_call.1} parent=63 // pred_fallthru
          _
      $region64: #{tpu_custom_call.1} parent=5 // pred_fallthru
        _
    $region6: #{tpu_custom_call.1} parent=1 // loop_footer
      %s22 = sadd.s32 1, %s18
    $region7: #{tpu_custom_call.1} parent=1 // loop_footer_branch
      %17 = sbr.rel target = $region3
    $region8: #{tpu_custom_call.1} parent=1 // loop_exit
      _
    %915 = vsyncpa [#allocation3], 1
    %s916 = scalar_lea.sflag [#allocation3], 1
    %917 = vsyncpa %s916, 1
    %918 = vsyncpa [#allocation6], 1
    %919 = vsyncpa [#allocation4], 1
    %s920 = scalar_lea.sflag [#allocation4], 1
    %921 = vsyncpa %s920, 1

</llo_original>
